<compile_context>
chip_gen: v6e
topology: v6e:2x2x1
jax: 0.10.0
libtpu: 0.0.40
codegen_flags: <defaults>
</compile_context>

<pallas_src>
import functools
import numpy as np
import jax
import jax.numpy as jnp
from jax.experimental import pallas as pl
from jax.experimental.pallas import tpu as pltpu

VOCAB = 10
EMBED_DIM = 5
ATT_DIM = 5
HIDDEN = 200


def _round_up(x, m):
    return ((x + m - 1) // m) * m


# --------------------------------------------------------------------------- #
# Kernel: one grid step handles TB batch rows, batch packed along lanes.
#   lut_ref : SMEM f32[2*VOCAB + 1]   ([score_lut | val_lut | b2])
#   tok_ref : VMEM int32 (L, TB)
#   mlp_ref : VMEM f32 (HIDDEN, 3)    (columns: w1, b1_eff, w2)
#   o_ref   : VMEM f32 (1, TB)
# --------------------------------------------------------------------------- #
def attention_kernel(lut_ref, tok_ref, mlp_ref, o_ref):
    tok = tok_ref[...]                                   # (L, TB) int32

    # Per-token LUT lookup via unrolled compare/select (10 vocab entries).
    s = jnp.zeros(tok.shape, jnp.float32)
    v = jnp.zeros(tok.shape, jnp.float32)
    for t in range(VOCAB):
        eq = tok == t
        s = jnp.where(eq, lut_ref[t], s)                 # attention logits
        v = jnp.where(eq, lut_ref[VOCAB + t], v)         # per-position values

    # Softmax over the sequence axis (sublanes) fused with the value sum.
    m = jnp.max(s, axis=0, keepdims=True)                # (1, TB)
    e = jnp.exp(s - m)                                   # (L, TB)  EUP
    den = jnp.sum(e, axis=0, keepdims=True)              # (1, TB)
    num = jnp.sum(e * v, axis=0, keepdims=True)          # (1, TB)
    weighted = num / den                                 # exact reciprocal

    # MLP head: 1 -> HIDDEN -> 1, hidden on sublanes, batch on lanes.
    w1 = mlp_ref[:, 0:1]                                 # (H, 1)
    b1 = mlp_ref[:, 1:2]                                 # (H, 1)  (WV bias folded in)
    w2 = mlp_ref[:, 2:3]                                 # (H, 1)
    h = jnp.maximum(weighted * w1 + b1, 0.0)             # (H, TB)
    logit = jnp.sum(h * w2, axis=0, keepdims=True) + lut_ref[2 * VOCAB]  # + b2

    # Exact sigmoid (exp on EUP, exact divide); lane-dense unmasked store.
    o_ref[...] = 1.0 / (1.0 + jnp.exp(-logit))


# --------------------------------------------------------------------------- #
# Parameter folding (tiny, done once in plain JAX).
# --------------------------------------------------------------------------- #
def _fold_params(p):
    f32 = jnp.float32
    A = p["query"].shape[1]

    # score_lut[v] = query . (WK @ embed[v]) / sqrt(A)
    # (the WK bias adds a constant to every logit and cancels in softmax)
    kq = (p["wk"].T.astype(f32) @ p["query"][0].astype(f32)) / np.sqrt(A)   # (E,)
    score_lut = p["embed"].astype(f32) @ kq                                 # (VOCAB,)

    # val_lut[v] = wv . embed[v]; the WV bias is folded into the MLP bias
    # because the softmax weights sum to 1.
    val_lut = p["embed"].astype(f32) @ p["wv"][0].astype(f32)               # (VOCAB,)

    w1 = p["w1"][:, 0].astype(f32)                                          # (H,)
    b1_eff = p["b1"][0].astype(f32) + p["bv"][0, 0].astype(f32) * w1        # (H,)
    w2 = p["w2"][0].astype(f32)                                             # (H,)
    b2 = p["b2"][0, 0].astype(f32)                                          # ()

    mlp = jnp.stack([w1, b1_eff, w2], axis=1)                               # (H, 3)
    return score_lut, val_lut, b2, mlp


# --------------------------------------------------------------------------- #
# Wrapper
# --------------------------------------------------------------------------- #
def attention_model(tokens, params, *, block_b=2048):
    """tokens: (B, L) int32 in [0, VOCAB). Returns (B, 1, 1) float32."""
    B, L = tokens.shape
    score_lut, val_lut, b2, mlp = _fold_params(params)
    lut = jnp.concatenate([score_lut, val_lut, b2.reshape(1)]).astype(jnp.float32)

    # Batch tile along the lane axis.  Cap so large batches split into >= 2
    # blocks (v7x dual TC) and the per-step working set stays small (v5e VMEM).
    tb = _round_up(max(1, -(-B // 2)), 128)
    tb = min(tb, _round_up(block_b, 128))
    grid_b = -(-B // tb)
    b_pad = grid_b * tb

    tok_t = tokens.astype(jnp.int32).T                          # (L, B) batch -> lanes
    if b_pad != B:
        tok_t = jnp.pad(tok_t, ((0, 0), (0, b_pad - B)))        # token 0 pad: harmless

    out = pl.pallas_call(
        attention_kernel,
        out_shape=jax.ShapeDtypeStruct((1, b_pad), jnp.float32),
        grid=(grid_b,),
        in_specs=[
            pl.BlockSpec(memory_space=pltpu.MemorySpace.SMEM),   # LUTs + b2 scalars
            pl.BlockSpec((L, tb), lambda b: (0, b)),             # transposed tokens
            pl.BlockSpec((HIDDEN, 3), lambda b: (0, 0)),         # MLP param columns
        ],
        out_specs=pl.BlockSpec((1, tb), lambda b: (0, b)),       # lane-dense output
        compiler_params=pltpu.CompilerParams(
            dimension_semantics=("parallel",)),
    )(lut, tok_t, mlp)

    return out[0, :B].reshape(B, 1, 1)


# --------------------------------------------------------------------------- #
# Pure-JAX reference mirroring the PyTorch forward, and parameter init.
# --------------------------------------------------------------------------- #
def reference_model(tokens, p):
    x = p["embed"][tokens]
    keys = x @ p["wk"].T + p["bk"][0]
    scores = (p["query"] @ jnp.swapaxes(keys, -2, -1)) / np.sqrt(ATT_DIM)
    attn = jax.nn.softmax(scores, axis=-1)
    vals = x @ p["wv"].T + p["bv"][0]
    w = attn @ vals
    h = jax.nn.relu(w @ p["w1"].T + p["b1"][0])
    return jax.nn.sigmoid(h @ p["w2"].T + p["b2"][0])


def init_params(key):
    ks = jax.random.split(key, 10)
    f32 = jnp.float32
    return {
        "embed": jax.random.normal(ks[0], (VOCAB, EMBED_DIM), f32),
        "query": jax.random.normal(ks[1], (1, ATT_DIM), f32),
        "wk": 0.3 * jax.random.normal(ks[2], (ATT_DIM, EMBED_DIM), f32),
        "bk": 0.1 * jax.random.normal(ks[3], (1, ATT_DIM), f32),
        "wv": 0.3 * jax.random.normal(ks[4], (1, EMBED_DIM), f32),
        "bv": 0.1 * jax.random.normal(ks[5], (1, 1), f32),
        "w1": 0.3 * jax.random.normal(ks[6], (HIDDEN, 1), f32),
        "b1": 0.1 * jax.random.normal(ks[7], (1, HIDDEN), f32),
        "w2": 0.1 * jax.random.normal(ks[8], (1, HIDDEN), f32),
        "b2": 0.1 * jax.random.normal(ks[9], (1, 1), f32),
    }


if __name__ == "__main__":
    key = jax.random.PRNGKey(0)
    pkey, tkey = jax.random.split(key)
    params = init_params(pkey)

    # Small shapes implied by the module: batch=2, seq=8.
    B, L = 2, 8
    tokens = jax.random.randint(tkey, (B, L), 0, VOCAB, dtype=jnp.int32)

    out = jax.jit(attention_model)(tokens, params)
    out = jax.block_until_ready(out)
    ref = reference_model(tokens, params)
    assert out.shape == (B, 1, 1), out.shape
    assert np.allclose(np.asarray(out), np.asarray(ref), atol=2e-3, rtol=2e-3), (
        np.asarray(out), np.asarray(ref))

    # Exercise the multi-block / padded-batch path (3 grid steps of 128 rows).
    B2 = 300
    tokens2 = jax.random.randint(jax.random.PRNGKey(1), (B2, L), 0, VOCAB,
                                 dtype=jnp.int32)
    out2 = jax.jit(functools.partial(attention_model, block_b=128))(tokens2, params)
    out2 = jax.block_until_ready(out2)
    ref2 = reference_model(tokens2, params)
    assert out2.shape == (B2, 1, 1), out2.shape
    assert np.allclose(np.asarray(out2), np.asarray(ref2), atol=2e-3, rtol=2e-3)

    print("KERNEL_OK")
</pallas_src>

<mosaic_0001>
module attributes {stable_mosaic.version = 11 : i64} {
  func.func @attention_kernel(%arg0: i32, %arg1: memref<21xf32, #tpu.memory_space<smem>>, %arg2: memref<8x128xi32, #tpu.memory_space<vmem>>, %arg3: memref<200x3xf32, #tpu.memory_space<vmem>>, %arg4: memref<1x128xf32, #tpu.memory_space<vmem>>) attributes {dimension_semantics = [#tpu.dimension_semantics<parallel>], iteration_bounds = array<i64: 1>, scalar_prefetch = 0 : i64, scratch_operands = 0 : i64, tpu.core_type = #tpu.core_type<tc>, window_params = [{transform_indices = @transform_0, window_bounds = array<i64: 21>}, {transform_indices = @transform_1, window_bounds = array<i64: 8, 128>}, {pipeline_mode = #tpu.pipeline_mode<synchronous>, transform_indices = @transform_2, window_bounds = array<i64: 200, 3>}, {transform_indices = @transform_3, window_bounds = array<i64: 1, 128>}]} {
    %c0 = arith.constant 0 : index
    %c0_0 = arith.constant 0 : index
    %0 = vector.load %arg2[%c0, %c0_0] : memref<8x128xi32, #tpu.memory_space<vmem>>, vector<8x128xi32>
    %cst = arith.constant 0.000000e+00 : f32
    %1 = vector.broadcast %cst : f32 to vector<8x128xf32>
    %cst_1 = arith.constant 0.000000e+00 : f32
    %2 = vector.broadcast %cst_1 : f32 to vector<8x128xf32>
    %c0_i32 = arith.constant 0 : i32
    %3 = vector.broadcast %c0_i32 : i32 to vector<8x128xi32>
    %4 = arith.cmpi eq, %0, %3 : vector<8x128xi32>
    %c0_2 = arith.constant 0 : index
    %5 = memref.load %arg1[%c0_2] : memref<21xf32, #tpu.memory_space<smem>>
    %6 = vector.broadcast %5 : f32 to vector<8x128xf32>
    %7 = arith.select %4, %6, %1 : vector<8x128xi1>, vector<8x128xf32>
    %c10 = arith.constant 10 : index
    %8 = memref.load %arg1[%c10] : memref<21xf32, #tpu.memory_space<smem>>
    %9 = vector.broadcast %8 : f32 to vector<8x128xf32>
    %10 = arith.select %4, %9, %2 : vector<8x128xi1>, vector<8x128xf32>
    %c1_i32 = arith.constant 1 : i32
    %11 = vector.broadcast %c1_i32 : i32 to vector<8x128xi32>
    %12 = arith.cmpi eq, %0, %11 : vector<8x128xi32>
    %c1 = arith.constant 1 : index
    %13 = memref.load %arg1[%c1] : memref<21xf32, #tpu.memory_space<smem>>
    %14 = vector.broadcast %13 : f32 to vector<8x128xf32>
    %15 = arith.select %12, %14, %7 : vector<8x128xi1>, vector<8x128xf32>
    %c11 = arith.constant 11 : index
    %16 = memref.load %arg1[%c11] : memref<21xf32, #tpu.memory_space<smem>>
    %17 = vector.broadcast %16 : f32 to vector<8x128xf32>
    %18 = arith.select %12, %17, %10 : vector<8x128xi1>, vector<8x128xf32>
    %c2_i32 = arith.constant 2 : i32
    %19 = vector.broadcast %c2_i32 : i32 to vector<8x128xi32>
    %20 = arith.cmpi eq, %0, %19 : vector<8x128xi32>
    %c2 = arith.constant 2 : index
    %21 = memref.load %arg1[%c2] : memref<21xf32, #tpu.memory_space<smem>>
    %22 = vector.broadcast %21 : f32 to vector<8x128xf32>
    %23 = arith.select %20, %22, %15 : vector<8x128xi1>, vector<8x128xf32>
    %c12 = arith.constant 12 : index
    %24 = memref.load %arg1[%c12] : memref<21xf32, #tpu.memory_space<smem>>
    %25 = vector.broadcast %24 : f32 to vector<8x128xf32>
    %26 = arith.select %20, %25, %18 : vector<8x128xi1>, vector<8x128xf32>
    %c3_i32 = arith.constant 3 : i32
    %27 = vector.broadcast %c3_i32 : i32 to vector<8x128xi32>
    %28 = arith.cmpi eq, %0, %27 : vector<8x128xi32>
    %c3 = arith.constant 3 : index
    %29 = memref.load %arg1[%c3] : memref<21xf32, #tpu.memory_space<smem>>
    %30 = vector.broadcast %29 : f32 to vector<8x128xf32>
    %31 = arith.select %28, %30, %23 : vector<8x128xi1>, vector<8x128xf32>
    %c13 = arith.constant 13 : index
    %32 = memref.load %arg1[%c13] : memref<21xf32, #tpu.memory_space<smem>>
    %33 = vector.broadcast %32 : f32 to vector<8x128xf32>
    %34 = arith.select %28, %33, %26 : vector<8x128xi1>, vector<8x128xf32>
    %c4_i32 = arith.constant 4 : i32
    %35 = vector.broadcast %c4_i32 : i32 to vector<8x128xi32>
    %36 = arith.cmpi eq, %0, %35 : vector<8x128xi32>
    %c4 = arith.constant 4 : index
    %37 = memref.load %arg1[%c4] : memref<21xf32, #tpu.memory_space<smem>>
    %38 = vector.broadcast %37 : f32 to vector<8x128xf32>
    %39 = arith.select %36, %38, %31 : vector<8x128xi1>, vector<8x128xf32>
    %c14 = arith.constant 14 : index
    %40 = memref.load %arg1[%c14] : memref<21xf32, #tpu.memory_space<smem>>
    %41 = vector.broadcast %40 : f32 to vector<8x128xf32>
    %42 = arith.select %36, %41, %34 : vector<8x128xi1>, vector<8x128xf32>
    %c5_i32 = arith.constant 5 : i32
    %43 = vector.broadcast %c5_i32 : i32 to vector<8x128xi32>
    %44 = arith.cmpi eq, %0, %43 : vector<8x128xi32>
    %c5 = arith.constant 5 : index
    %45 = memref.load %arg1[%c5] : memref<21xf32, #tpu.memory_space<smem>>
    %46 = vector.broadcast %45 : f32 to vector<8x128xf32>
    %47 = arith.select %44, %46, %39 : vector<8x128xi1>, vector<8x128xf32>
    %c15 = arith.constant 15 : index
    %48 = memref.load %arg1[%c15] : memref<21xf32, #tpu.memory_space<smem>>
    %49 = vector.broadcast %48 : f32 to vector<8x128xf32>
    %50 = arith.select %44, %49, %42 : vector<8x128xi1>, vector<8x128xf32>
    %c6_i32 = arith.constant 6 : i32
    %51 = vector.broadcast %c6_i32 : i32 to vector<8x128xi32>
    %52 = arith.cmpi eq, %0, %51 : vector<8x128xi32>
    %c6 = arith.constant 6 : index
    %53 = memref.load %arg1[%c6] : memref<21xf32, #tpu.memory_space<smem>>
    %54 = vector.broadcast %53 : f32 to vector<8x128xf32>
    %55 = arith.select %52, %54, %47 : vector<8x128xi1>, vector<8x128xf32>
    %c16 = arith.constant 16 : index
    %56 = memref.load %arg1[%c16] : memref<21xf32, #tpu.memory_space<smem>>
    %57 = vector.broadcast %56 : f32 to vector<8x128xf32>
    %58 = arith.select %52, %57, %50 : vector<8x128xi1>, vector<8x128xf32>
    %c7_i32 = arith.constant 7 : i32
    %59 = vector.broadcast %c7_i32 : i32 to vector<8x128xi32>
    %60 = arith.cmpi eq, %0, %59 : vector<8x128xi32>
    %c7 = arith.constant 7 : index
    %61 = memref.load %arg1[%c7] : memref<21xf32, #tpu.memory_space<smem>>
    %62 = vector.broadcast %61 : f32 to vector<8x128xf32>
    %63 = arith.select %60, %62, %55 : vector<8x128xi1>, vector<8x128xf32>
    %c17 = arith.constant 17 : index
    %64 = memref.load %arg1[%c17] : memref<21xf32, #tpu.memory_space<smem>>
    %65 = vector.broadcast %64 : f32 to vector<8x128xf32>
    %66 = arith.select %60, %65, %58 : vector<8x128xi1>, vector<8x128xf32>
    %c8_i32 = arith.constant 8 : i32
    %67 = vector.broadcast %c8_i32 : i32 to vector<8x128xi32>
    %68 = arith.cmpi eq, %0, %67 : vector<8x128xi32>
    %c8 = arith.constant 8 : index
    %69 = memref.load %arg1[%c8] : memref<21xf32, #tpu.memory_space<smem>>
    %70 = vector.broadcast %69 : f32 to vector<8x128xf32>
    %71 = arith.select %68, %70, %63 : vector<8x128xi1>, vector<8x128xf32>
    %c18 = arith.constant 18 : index
    %72 = memref.load %arg1[%c18] : memref<21xf32, #tpu.memory_space<smem>>
    %73 = vector.broadcast %72 : f32 to vector<8x128xf32>
    %74 = arith.select %68, %73, %66 : vector<8x128xi1>, vector<8x128xf32>
    %c9_i32 = arith.constant 9 : i32
    %75 = vector.broadcast %c9_i32 : i32 to vector<8x128xi32>
    %76 = arith.cmpi eq, %0, %75 : vector<8x128xi32>
    %c9 = arith.constant 9 : index
    %77 = memref.load %arg1[%c9] : memref<21xf32, #tpu.memory_space<smem>>
    %78 = vector.broadcast %77 : f32 to vector<8x128xf32>
    %79 = arith.select %76, %78, %71 : vector<8x128xi1>, vector<8x128xf32>
    %c19 = arith.constant 19 : index
    %80 = memref.load %arg1[%c19] : memref<21xf32, #tpu.memory_space<smem>>
    %81 = vector.broadcast %80 : f32 to vector<8x128xf32>
    %82 = arith.select %76, %81, %74 : vector<8x128xi1>, vector<8x128xf32>
    %cst_3 = arith.constant dense<0xFF800000> : vector<128xf32>
    %83 = vector.multi_reduction <maximumf>, %79, %cst_3 [0] : vector<8x128xf32> to vector<128xf32>
    %84 = vector.shape_cast %83 : vector<128xf32> to vector<1x128xf32>
    %85 = vector.broadcast %84 : vector<1x128xf32> to vector<8x128xf32>
    %86 = arith.subf %79, %85 : vector<8x128xf32>
    %87 = math.exp %86 : vector<8x128xf32>
    %cst_4 = arith.constant dense<0.000000e+00> : vector<128xf32>
    %88 = vector.multi_reduction <add>, %87, %cst_4 [0] : vector<8x128xf32> to vector<128xf32>
    %89 = vector.shape_cast %88 : vector<128xf32> to vector<1x128xf32>
    %90 = arith.mulf %87, %82 : vector<8x128xf32>
    %cst_5 = arith.constant dense<0.000000e+00> : vector<128xf32>
    %91 = vector.multi_reduction <add>, %90, %cst_5 [0] : vector<8x128xf32> to vector<128xf32>
    %92 = vector.shape_cast %91 : vector<128xf32> to vector<1x128xf32>
    %93 = arith.divf %92, %89 : vector<1x128xf32>
    %c0_6 = arith.constant 0 : index
    %c0_7 = arith.constant 0 : index
    %94 = vector.load %arg3[%c0_6, %c0_7] : memref<200x3xf32, #tpu.memory_space<vmem>>, vector<200x1xf32>
    %c0_8 = arith.constant 0 : index
    %c1_9 = arith.constant 1 : index
    %95 = vector.load %arg3[%c0_8, %c1_9] : memref<200x3xf32, #tpu.memory_space<vmem>>, vector<200x1xf32>
    %c0_10 = arith.constant 0 : index
    %c2_11 = arith.constant 2 : index
    %96 = vector.load %arg3[%c0_10, %c2_11] : memref<200x3xf32, #tpu.memory_space<vmem>>, vector<200x1xf32>
    %97 = vector.broadcast %93 : vector<1x128xf32> to vector<200x128xf32>
    %98 = vector.broadcast %94 : vector<200x1xf32> to vector<200x128xf32>
    %99 = arith.mulf %97, %98 : vector<200x128xf32>
    %100 = vector.broadcast %95 : vector<200x1xf32> to vector<200x128xf32>
    %101 = arith.addf %99, %100 : vector<200x128xf32>
    %cst_12 = arith.constant 0.000000e+00 : f32
    %102 = vector.broadcast %cst_12 : f32 to vector<200x128xf32>
    %103 = arith.maximumf %101, %102 : vector<200x128xf32>
    %104 = vector.broadcast %96 : vector<200x1xf32> to vector<200x128xf32>
    %105 = arith.mulf %103, %104 : vector<200x128xf32>
    %cst_13 = arith.constant dense<0.000000e+00> : vector<128xf32>
    %106 = vector.multi_reduction <add>, %105, %cst_13 [0] : vector<200x128xf32> to vector<128xf32>
    %107 = vector.shape_cast %106 : vector<128xf32> to vector<1x128xf32>
    %c20 = arith.constant 20 : index
    %108 = memref.load %arg1[%c20] : memref<21xf32, #tpu.memory_space<smem>>
    %109 = vector.broadcast %108 : f32 to vector<1x128xf32>
    %110 = arith.addf %107, %109 : vector<1x128xf32>
    %cst_14 = arith.constant 0.000000e+00 : f32
    %111 = vector.broadcast %cst_14 : f32 to vector<1x128xf32>
    %112 = arith.subf %111, %110 : vector<1x128xf32>
    %113 = math.exp %112 : vector<1x128xf32>
    %cst_15 = arith.constant 1.000000e+00 : f32
    %114 = vector.broadcast %cst_15 : f32 to vector<1x128xf32>
    %115 = arith.addf %114, %113 : vector<1x128xf32>
    %cst_16 = arith.constant 1.000000e+00 : f32
    %116 = vector.broadcast %cst_16 : f32 to vector<1x128xf32>
    %117 = arith.divf %116, %115 : vector<1x128xf32>
    %c0_17 = arith.constant 0 : index
    %c0_18 = arith.constant 0 : index
    %118 = vector.load %arg4[%c0_17, %c0_18] : memref<1x128xf32, #tpu.memory_space<vmem>>, vector<1x128xf32>
    tpu.vector_store %arg4[%c0_17, %c0_18], %117 {strides = array<i32>} : memref<1x128xf32, #tpu.memory_space<vmem>>, vector<1x128xf32>,
    return
  }
  func.func @transform_0(%arg0: i32) -> i32 {
    %c0_i32 = arith.constant 0 : i32
    %c0_i32_0 = arith.constant 0 : i32
    return %c0_i32 : i32
  }
  func.func @transform_1(%arg0: i32) -> (i32, i32) {
    %c0_i32 = arith.constant 0 : i32
    %c0_i32_0 = arith.constant 0 : i32
    return %c0_i32, %arg0 : i32, i32
  }
  func.func @transform_2(%arg0: i32) -> (i32, i32) {
    %c0_i32 = arith.constant 0 : i32
    %c0_i32_0 = arith.constant 0 : i32
    %c0_i32_1 = arith.constant 0 : i32
    return %c0_i32, %c0_i32_0 : i32, i32
  }
  func.func @transform_3(%arg0: i32) -> (i32, i32) {
    %c0_i32 = arith.constant 0 : i32
    %c0_i32_0 = arith.constant 0 : i32
    return %c0_i32, %arg0 : i32, i32
  }
}

</mosaic_0001>

<llo_original>
// kernel: attention_model.1
$region0: #{attention_model.1}
  #allocation0 [shape = 'u32[]', space=smem, size = 0x4, offset = 0x4, fixed_abs, tag = 'smem constant byte address 0x4 - core index']
  #allocation1 [shape = 'u32[144,128]{1,0:T(1,128)}', space=vmem, size = 0x12000, scoped, tag = 'internal scratch']
  %s0 = inlined_call_operand.vmem [shape: f32[21], index: 0, kind: input, shape index: {}]
  %s1 = inlined_call_operand.vmem [shape: s32[8,128], index: 1, kind: input, shape index: {}]
  %s2 = inlined_call_operand.vmem [shape: f32[200,3], index: 2, kind: input, shape index: {}]
  %s3 = inlined_call_operand.vmem [shape: f32[1,128], index: 3, kind: output, shape index: {}]
  %s4 = sld [smem:[#allocation0]]
  $region26: #{attention_model.1} parent=0
    _
  %s6 = ssub.s32 1, %s4
  %s7 = scalar_select 0, %s6, %s4
  $region1: #{attention_model.1} parent=0
    #allocation2 [shape = 'u8[512]{0}', space=smem, size = 0x200, scoped, tag = 'input window, operand 0, single buffered']
    #allocation3 [shape = 's32[1]{0}', space=sflag, size = 0x4, scoped, tag = 'scoped memory for attention_model.1']
    %8 = vsyncpa [#allocation3], 0
    // Predicated region
    $region2: #{attention_model.1} parent=1 // pred_check
      _
    $region3: #{attention_model.1} parent=1 // pred_check_branch
      %10 = sbr.rel (0) target = $region5
    $region4: #{attention_model.1} parent=1 // pred_region
      %s12 = ssub.s32 16, 16
      %13 = vsyncadd [#allocation3], %s12
      %s15 = sshll.u32 %s0, 4
      %s16 = int_to_ptr.vmem [resolvable:$true] %s15
      %18 = dma.vmem_to_smem %s16, 16, [#allocation2], [#allocation3]
    $region5: #{attention_model.1} parent=1 // pred_fallthru
      _
    // Predicated region
    $region6: #{attention_model.1} parent=1 // pred_check
      _
    $region7: #{attention_model.1} parent=1 // pred_check_branch
      %20 = sbr.rel (0) target = $region9
    $region8: #{attention_model.1} parent=1 // pred_region
      _
    $region9: #{attention_model.1} parent=1 // pred_fallthru
      _
    // Predicated region
    $region10: #{attention_model.1} parent=1 // pred_check
      _
    $region11: #{attention_model.1} parent=1 // pred_check_branch
      %22 = sbr.rel (0) target = $region13
    $region12: #{attention_model.1} parent=1 // pred_region
      _
    $region13: #{attention_model.1} parent=1 // pred_fallthru
      _
    // Predicated region
    $region14: #{attention_model.1} parent=1 // pred_check
      _
    $region15: #{attention_model.1} parent=1 // pred_check_branch
      %24 = sbr.rel (0) target = $region17
    $region16: #{attention_model.1} parent=1 // pred_region
      %25 = dma.done [#allocation3], 16
    $region17: #{attention_model.1} parent=1 // pred_fallthru
      _
    %26 = sfence
    %v27 = vld [vmem:[%s1] sm:$0xff]
    %vm28 = vcmp.eq.s32.totalorder %v27, 0
    %s29 = sld [smem:[#allocation2]]
    %v30 = vstv %s29
    %v31 = vsel %vm28, %v30, 0.0
    %s32 = sld [smem:[#allocation2 + $0xa]]
    %v33 = vstv %s32
    %v34 = vsel %vm28, %v33, 0.0
    %vm35 = vcmp.eq.s32.totalorder %v27, 1
    %s36 = sld [smem:[#allocation2 + $0x1]]
    %v37 = vstv %s36
    %v38 = vsel %vm35, %v37, %v31
    %s39 = sld [smem:[#allocation2 + $0xb]]
    %v40 = vstv %s39
    %v41 = vsel %vm35, %v40, %v34
    %vm42 = vcmp.eq.s32.totalorder %v27, 2
    %s43 = sld [smem:[#allocation2 + $0x2]]
    %v44 = vstv %s43
    %v45 = vsel %vm42, %v44, %v38
    %s46 = sld [smem:[#allocation2 + $0xc]]
    %v47 = vstv %s46
    %v48 = vsel %vm42, %v47, %v41
    %vm49 = vcmp.eq.s32.totalorder %v27, 3
    %s50 = sld [smem:[#allocation2 + $0x3]]
    %v51 = vstv %s50
    %v52 = vsel %vm49, %v51, %v45
    %s53 = sld [smem:[#allocation2 + $0xd]]
    %v54 = vstv %s53
    %v55 = vsel %vm49, %v54, %v48
    %vm56 = vcmp.eq.s32.totalorder %v27, 4
    %s57 = sld [smem:[#allocation2 + $0x4]]
    %v58 = vstv %s57
    %v59 = vsel %vm56, %v58, %v52
    %s60 = sld [smem:[#allocation2 + $0xe]]
    %v61 = vstv %s60
    %v62 = vsel %vm56, %v61, %v55
    %vm63 = vcmp.eq.s32.totalorder %v27, 5
    %s64 = sld [smem:[#allocation2 + $0x5]]
    %v65 = vstv %s64
    %v66 = vsel %vm63, %v65, %v59
    %s67 = sld [smem:[#allocation2 + $0xf]]
    %v68 = vstv %s67
    %v69 = vsel %vm63, %v68, %v62
    %vm70 = vcmp.eq.s32.totalorder %v27, 6
    %s71 = sld [smem:[#allocation2 + $0x6]]
    %v72 = vstv %s71
    %v73 = vsel %vm70, %v72, %v66
    %s74 = sld [smem:[#allocation2 + $0x10]]
    %v75 = vstv %s74
    %v76 = vsel %vm70, %v75, %v69
    %vm77 = vcmp.eq.s32.totalorder %v27, 7
    %s78 = sld [smem:[#allocation2 + $0x7]]
    %v79 = vstv %s78
    %v80 = vsel %vm77, %v79, %v73
    %s81 = sld [smem:[#allocation2 + $0x11]]
    %v82 = vstv %s81
    %v83 = vsel %vm77, %v82, %v76
    %vm84 = vcmp.eq.s32.totalorder %v27, 8
    %s85 = sld [smem:[#allocation2 + $0x8]]
    %v86 = vstv %s85
    %v87 = vsel %vm84, %v86, %v80
    %s88 = sld [smem:[#allocation2 + $0x12]]
    %v89 = vstv %s88
    %v90 = vsel %vm84, %v89, %v83
    %vm91 = vcmp.eq.s32.totalorder %v27, 9
    %s92 = sld [smem:[#allocation2 + $0x9]]
    %v93 = vstv %s92
    %v94 = vsel %vm91, %v93, %v87
    %s95 = sld [smem:[#allocation2 + $0x13]]
    %v96 = vstv %s95
    %v97 = vsel %vm91, %v96, %v90
    %v98 = vrot.slane %v94, 4
    %v99 = vmax.f32 %v94, %v98
    %v100 = vrot.slane %v99, 2
    %v101 = vmax.f32 %v99, %v100
    %v102 = vrot.slane %v101, 1
    %v103 = vmax.f32 %v101, %v102
    %v104 = vsub.f32 %v94, %v103
    %v105 = vmul.f32 %v104, 1.442695
    %v106 = vpow.pop %v105
    %v107 = vrot.slane %v106, 4
    %v108 = vadd.f32 %v106, %v107
    %v109 = vrot.slane %v108, 2
    %v110 = vadd.f32 %v108, %v109
    %v111 = vrot.slane %v110, 1
    %v112 = vadd.f32 %v110, %v111
    %v113 = vmul.f32 %v106, %v97
    %v114 = vrot.slane %v113, 4
    %v115 = vadd.f32 %v113, %v114
    %v116 = vrot.slane %v115, 2
    %v117 = vadd.f32 %v115, %v116
    %v118 = vrot.slane %v117, 1
    %v119 = vadd.f32 %v117, %v118
    %v120 = vrcp.pop %v112
    %v121 = vmul.f32 %v119, %v120
    %v122 = vld [vmem:[%s2] sm:$0xff]
    %v123 = vld [vmem:[%s2 + $0x8] sm:$0xff]
    %v124 = vld [vmem:[%s2 + $0x10] sm:$0xff]
    %v125 = vld [vmem:[%s2 + $0x18] sm:$0xff]
    %v126 = vld [vmem:[%s2 + $0x20] sm:$0xff]
    %v127 = vld [vmem:[%s2 + $0x28] sm:$0xff]
    %v128 = vld [vmem:[%s2 + $0x30] sm:$0xff]
    %v129 = vld [vmem:[%s2 + $0x38] sm:$0xff]
    %v130 = vld [vmem:[%s2 + $0x40] sm:$0xff]
    %v131 = vld [vmem:[%s2 + $0x48] sm:$0xff]
    %v132 = vld [vmem:[%s2 + $0x50] sm:$0xff]
    %v133 = vld [vmem:[%s2 + $0x58] sm:$0xff]
    %v134 = vld [vmem:[%s2 + $0x60] sm:$0xff]
    %v135 = vld [vmem:[%s2 + $0x68] sm:$0xff]
    %v136 = vld [vmem:[%s2 + $0x70] sm:$0xff]
    %v137 = vld [vmem:[%s2 + $0x78] sm:$0xff]
    %v138 = vld [vmem:[%s2 + $0x80] sm:$0xff]
    %v139 = vld [vmem:[%s2 + $0x88] sm:$0xff]
    %v140 = vld [vmem:[%s2 + $0x90] sm:$0xff]
    %v141 = vld [vmem:[%s2 + $0x98] sm:$0xff]
    %v142 = vld [vmem:[%s2 + $0xa0] sm:$0xff]
    %v143 = vld [vmem:[%s2 + $0xa8] sm:$0xff]
    %v144 = vld [vmem:[%s2 + $0xb0] sm:$0xff]
    %v145 = vld [vmem:[%s2 + $0xb8] sm:$0xff]
    %v146 = vld [vmem:[%s2 + $0xc0] sm:$0xff]
    %148 = vset.pattern.permute.xlu0 0
    %149 = vperm.xlu0 %148, %v122
    %v150 = vpop.permute.xlu0 %149
    %153 = vset.pattern.permute.xlu0 0
    %154 = vperm.xlu0 %153, %v123
    %v155 = vpop.permute.xlu0 %154
    %158 = vset.pattern.permute.xlu0 0
    %159 = vperm.xlu0 %158, %v124
    %v160 = vpop.permute.xlu0 %159
    %163 = vset.pattern.permute.xlu0 0
    %164 = vperm.xlu0 %163, %v125
    %v165 = vpop.permute.xlu0 %164
    %168 = vset.pattern.permute.xlu0 0
    %169 = vperm.xlu0 %168, %v126
    %v170 = vpop.permute.xlu0 %169
    %173 = vset.pattern.permute.xlu0 0
    %174 = vperm.xlu0 %173, %v127
    %v175 = vpop.permute.xlu0 %174
    %178 = vset.pattern.permute.xlu0 0
    %179 = vperm.xlu0 %178, %v128
    %v180 = vpop.permute.xlu0 %179
    %183 = vset.pattern.permute.xlu0 0
    %184 = vperm.xlu0 %183, %v129
    %v185 = vpop.permute.xlu0 %184
    %188 = vset.pattern.permute.xlu0 0
    %189 = vperm.xlu0 %188, %v130
    %v190 = vpop.permute.xlu0 %189
    %193 = vset.pattern.permute.xlu0 0
    %194 = vperm.xlu0 %193, %v131
    %v195 = vpop.permute.xlu0 %194
    %198 = vset.pattern.permute.xlu0 0
    %199 = vperm.xlu0 %198, %v132
    %v200 = vpop.permute.xlu0 %199
    %203 = vset.pattern.permute.xlu0 0
    %204 = vperm.xlu0 %203, %v133
    %v205 = vpop.permute.xlu0 %204
    %208 = vset.pattern.permute.xlu0 0
    %209 = vperm.xlu0 %208, %v134
    %v210 = vpop.permute.xlu0 %209
    %213 = vset.pattern.permute.xlu0 0
    %214 = vperm.xlu0 %213, %v135
    %v215 = vpop.permute.xlu0 %214
    %218 = vset.pattern.permute.xlu0 0
    %219 = vperm.xlu0 %218, %v136
    %v220 = vpop.permute.xlu0 %219
    %223 = vset.pattern.permute.xlu0 0
    %224 = vperm.xlu0 %223, %v137
    %v225 = vpop.permute.xlu0 %224
    %228 = vset.pattern.permute.xlu0 0
    %229 = vperm.xlu0 %228, %v138
    %v230 = vpop.permute.xlu0 %229
    %233 = vset.pattern.permute.xlu0 0
    %234 = vperm.xlu0 %233, %v139
    %v235 = vpop.permute.xlu0 %234
    %238 = vset.pattern.permute.xlu0 0
    %239 = vperm.xlu0 %238, %v140
    %v240 = vpop.permute.xlu0 %239
    %243 = vset.pattern.permute.xlu0 0
    %244 = vperm.xlu0 %243, %v141
    %v245 = vpop.permute.xlu0 %244
    %248 = vset.pattern.permute.xlu0 0
    %249 = vperm.xlu0 %248, %v142
    %v250 = vpop.permute.xlu0 %249
    %253 = vset.pattern.permute.xlu0 0
    %254 = vperm.xlu0 %253, %v143
    %v255 = vpop.permute.xlu0 %254
    %258 = vset.pattern.permute.xlu0 0
    %259 = vperm.xlu0 %258, %v144
    %v260 = vpop.permute.xlu0 %259
    %263 = vset.pattern.permute.xlu0 0
    %264 = vperm.xlu0 %263, %v145
    %v265 = vpop.permute.xlu0 %264
    %268 = vset.pattern.permute.xlu0 0
    %269 = vperm.xlu0 %268, %v146
    %v270 = vpop.permute.xlu0 %269
    %v272 = vmul.f32 %v121, %v150
    %v273 = vmul.f32 %v121, %v155
    %v274 = vmul.f32 %v121, %v160
    %v275 = vmul.f32 %v121, %v165
    %v276 = vmul.f32 %v121, %v170
    %v277 = vmul.f32 %v121, %v175
    %v278 = vmul.f32 %v121, %v180
    %v279 = vmul.f32 %v121, %v185
    %v280 = vmul.f32 %v121, %v190
    %v281 = vmul.f32 %v121, %v195
    %v282 = vmul.f32 %v121, %v200
    %v283 = vmul.f32 %v121, %v205
    %v284 = vmul.f32 %v121, %v210
    %v285 = vmul.f32 %v121, %v215
    %v286 = vmul.f32 %v121, %v220
    %v287 = vmul.f32 %v121, %v225
    %v288 = vmul.f32 %v121, %v230
    %v289 = vmul.f32 %v121, %v235
    %v290 = vmul.f32 %v121, %v240
    %v291 = vmul.f32 %v121, %v245
    %v292 = vmul.f32 %v121, %v250
    %v293 = vmul.f32 %v121, %v255
    %v294 = vmul.f32 %v121, %v260
    %v295 = vmul.f32 %v121, %v265
    %v296 = vmul.f32 %v121, %v270
    %297 = vset.pattern.permute.xlu0 1
    %298 = vperm.xlu0 %297, %v122
    %v299 = vpop.permute.xlu0 %298
    %301 = vset.pattern.permute.xlu0 1
    %302 = vperm.xlu0 %301, %v123
    %v303 = vpop.permute.xlu0 %302
    %305 = vset.pattern.permute.xlu0 1
    %306 = vperm.xlu0 %305, %v124
    %v307 = vpop.permute.xlu0 %306
    %309 = vset.pattern.permute.xlu0 1
    %310 = vperm.xlu0 %309, %v125
    %v311 = vpop.permute.xlu0 %310
    %313 = vset.pattern.permute.xlu0 1
    %314 = vperm.xlu0 %313, %v126
    %v315 = vpop.permute.xlu0 %314
    %317 = vset.pattern.permute.xlu0 1
    %318 = vperm.xlu0 %317, %v127
    %v319 = vpop.permute.xlu0 %318
    %321 = vset.pattern.permute.xlu0 1
    %322 = vperm.xlu0 %321, %v128
    %v323 = vpop.permute.xlu0 %322
    %325 = vset.pattern.permute.xlu0 1
    %326 = vperm.xlu0 %325, %v129
    %v327 = vpop.permute.xlu0 %326
    %329 = vset.pattern.permute.xlu0 1
    %330 = vperm.xlu0 %329, %v130
    %v331 = vpop.permute.xlu0 %330
    %333 = vset.pattern.permute.xlu0 1
    %334 = vperm.xlu0 %333, %v131
    %v335 = vpop.permute.xlu0 %334
    %337 = vset.pattern.permute.xlu0 1
    %338 = vperm.xlu0 %337, %v132
    %v339 = vpop.permute.xlu0 %338
    %341 = vset.pattern.permute.xlu0 1
    %342 = vperm.xlu0 %341, %v133
    %v343 = vpop.permute.xlu0 %342
    %345 = vset.pattern.permute.xlu0 1
    %346 = vperm.xlu0 %345, %v134
    %v347 = vpop.permute.xlu0 %346
    %349 = vset.pattern.permute.xlu0 1
    %350 = vperm.xlu0 %349, %v135
    %v351 = vpop.permute.xlu0 %350
    %353 = vset.pattern.permute.xlu0 1
    %354 = vperm.xlu0 %353, %v136
    %v355 = vpop.permute.xlu0 %354
    %357 = vset.pattern.permute.xlu0 1
    %358 = vperm.xlu0 %357, %v137
    %v359 = vpop.permute.xlu0 %358
    %361 = vset.pattern.permute.xlu0 1
    %362 = vperm.xlu0 %361, %v138
    %v363 = vpop.permute.xlu0 %362
    %365 = vset.pattern.permute.xlu0 1
    %366 = vperm.xlu0 %365, %v139
    %v367 = vpop.permute.xlu0 %366
    %369 = vset.pattern.permute.xlu0 1
    %370 = vperm.xlu0 %369, %v140
    %v371 = vpop.permute.xlu0 %370
    %373 = vset.pattern.permute.xlu0 1
    %374 = vperm.xlu0 %373, %v141
    %v375 = vpop.permute.xlu0 %374
    %377 = vset.pattern.permute.xlu0 1
    %378 = vperm.xlu0 %377, %v142
    %v379 = vpop.permute.xlu0 %378
    %381 = vset.pattern.permute.xlu0 1
    %382 = vperm.xlu0 %381, %v143
    %v383 = vpop.permute.xlu0 %382
    %385 = vset.pattern.permute.xlu0 1
    %386 = vperm.xlu0 %385, %v144
    %v387 = vpop.permute.xlu0 %386
    %389 = vset.pattern.permute.xlu0 1
    %390 = vperm.xlu0 %389, %v145
    %v391 = vpop.permute.xlu0 %390
    %393 = vset.pattern.permute.xlu0 1
    %394 = vperm.xlu0 %393, %v146
    %v395 = vpop.permute.xlu0 %394
    %v397 = vadd.f32 %v272, %v299
    %v398 = vadd.f32 %v273, %v303
    %v399 = vadd.f32 %v274, %v307
    %v400 = vadd.f32 %v275, %v311
    %v401 = vadd.f32 %v276, %v315
    %v402 = vadd.f32 %v277, %v319
    %v403 = vadd.f32 %v278, %v323
    %v404 = vadd.f32 %v279, %v327
    %v405 = vadd.f32 %v280, %v331
    %v406 = vadd.f32 %v281, %v335
    %v407 = vadd.f32 %v282, %v339
    %v408 = vadd.f32 %v283, %v343
    %v409 = vadd.f32 %v284, %v347
    %v410 = vadd.f32 %v285, %v351
    %v411 = vadd.f32 %v286, %v355
    %v412 = vadd.f32 %v287, %v359
    %v413 = vadd.f32 %v288, %v363
    %v414 = vadd.f32 %v289, %v367
    %v415 = vadd.f32 %v290, %v371
    %v416 = vadd.f32 %v291, %v375
    %v417 = vadd.f32 %v292, %v379
    %v418 = vadd.f32 %v293, %v383
    %v419 = vadd.f32 %v294, %v387
    %v420 = vadd.f32 %v295, %v391
    %v421 = vadd.f32 %v296, %v395
    %v422 = vmax.f32 %v397, 0.0
    %v423 = vmax.f32 %v398, 0.0
    %v424 = vmax.f32 %v399, 0.0
    %v425 = vmax.f32 %v400, 0.0
    %v426 = vmax.f32 %v401, 0.0
    %v427 = vmax.f32 %v402, 0.0
    %v428 = vmax.f32 %v403, 0.0
    %v429 = vmax.f32 %v404, 0.0
    %v430 = vmax.f32 %v405, 0.0
    %v431 = vmax.f32 %v406, 0.0
    %v432 = vmax.f32 %v407, 0.0
    %v433 = vmax.f32 %v408, 0.0
    %v434 = vmax.f32 %v409, 0.0
    %v435 = vmax.f32 %v410, 0.0
    %v436 = vmax.f32 %v411, 0.0
    %v437 = vmax.f32 %v412, 0.0
    %v438 = vmax.f32 %v413, 0.0
    %v439 = vmax.f32 %v414, 0.0
    %v440 = vmax.f32 %v415, 0.0
    %v441 = vmax.f32 %v416, 0.0
    %v442 = vmax.f32 %v417, 0.0
    %v443 = vmax.f32 %v418, 0.0
    %v444 = vmax.f32 %v419, 0.0
    %v445 = vmax.f32 %v420, 0.0
    %v446 = vmax.f32 %v421, 0.0
    %447 = vset.pattern.permute.xlu0 2
    %448 = vperm.xlu0 %447, %v122
    %v449 = vpop.permute.xlu0 %448
    %451 = vset.pattern.permute.xlu0 2
    %452 = vperm.xlu0 %451, %v123
    %v453 = vpop.permute.xlu0 %452
    %455 = vset.pattern.permute.xlu0 2
    %456 = vperm.xlu0 %455, %v124
    %v457 = vpop.permute.xlu0 %456
    %459 = vset.pattern.permute.xlu0 2
    %460 = vperm.xlu0 %459, %v125
    %v461 = vpop.permute.xlu0 %460
    %463 = vset.pattern.permute.xlu0 2
    %464 = vperm.xlu0 %463, %v126
    %v465 = vpop.permute.xlu0 %464
    %467 = vset.pattern.permute.xlu0 2
    %468 = vperm.xlu0 %467, %v127
    %v469 = vpop.permute.xlu0 %468
    %471 = vset.pattern.permute.xlu0 2
    %472 = vperm.xlu0 %471, %v128
    %v473 = vpop.permute.xlu0 %472
    %475 = vset.pattern.permute.xlu0 2
    %476 = vperm.xlu0 %475, %v129
    %v477 = vpop.permute.xlu0 %476
    %479 = vset.pattern.permute.xlu0 2
    %480 = vperm.xlu0 %479, %v130
    %v481 = vpop.permute.xlu0 %480
    %483 = vset.pattern.permute.xlu0 2
    %484 = vperm.xlu0 %483, %v131
    %v485 = vpop.permute.xlu0 %484
    %487 = vset.pattern.permute.xlu0 2
    %488 = vperm.xlu0 %487, %v132
    %v489 = vpop.permute.xlu0 %488
    %491 = vset.pattern.permute.xlu0 2
    %492 = vperm.xlu0 %491, %v133
    %v493 = vpop.permute.xlu0 %492
    %495 = vset.pattern.permute.xlu0 2
    %496 = vperm.xlu0 %495, %v134
    %v497 = vpop.permute.xlu0 %496
    %499 = vset.pattern.permute.xlu0 2
    %500 = vperm.xlu0 %499, %v135
    %v501 = vpop.permute.xlu0 %500
    %503 = vset.pattern.permute.xlu0 2
    %504 = vperm.xlu0 %503, %v136
    %v505 = vpop.permute.xlu0 %504
    %507 = vset.pattern.permute.xlu0 2
    %508 = vperm.xlu0 %507, %v137
    %v509 = vpop.permute.xlu0 %508
    %511 = vset.pattern.permute.xlu0 2
    %512 = vperm.xlu0 %511, %v138
    %v513 = vpop.permute.xlu0 %512
    %515 = vset.pattern.permute.xlu0 2
    %516 = vperm.xlu0 %515, %v139
    %v517 = vpop.permute.xlu0 %516
    %519 = vset.pattern.permute.xlu0 2
    %520 = vperm.xlu0 %519, %v140
    %v521 = vpop.permute.xlu0 %520
    %523 = vset.pattern.permute.xlu0 2
    %524 = vperm.xlu0 %523, %v141
    %v525 = vpop.permute.xlu0 %524
    %527 = vset.pattern.permute.xlu0 2
    %528 = vperm.xlu0 %527, %v142
    %v529 = vpop.permute.xlu0 %528
    %531 = vset.pattern.permute.xlu0 2
    %532 = vperm.xlu0 %531, %v143
    %v533 = vpop.permute.xlu0 %532
    %535 = vset.pattern.permute.xlu0 2
    %536 = vperm.xlu0 %535, %v144
    %v537 = vpop.permute.xlu0 %536
    %539 = vset.pattern.permute.xlu0 2
    %540 = vperm.xlu0 %539, %v145
    %v541 = vpop.permute.xlu0 %540
    %543 = vset.pattern.permute.xlu0 2
    %544 = vperm.xlu0 %543, %v146
    %v545 = vpop.permute.xlu0 %544
    %v547 = vmul.f32 %v422, %v449
    %v548 = vmul.f32 %v423, %v453
    %v549 = vmul.f32 %v424, %v457
    %v550 = vmul.f32 %v425, %v461
    %v551 = vmul.f32 %v426, %v465
    %v552 = vmul.f32 %v427, %v469
    %v553 = vmul.f32 %v428, %v473
    %v554 = vmul.f32 %v429, %v477
    %v555 = vmul.f32 %v430, %v481
    %v556 = vmul.f32 %v431, %v485
    %v557 = vmul.f32 %v432, %v489
    %v558 = vmul.f32 %v433, %v493
    %v559 = vmul.f32 %v434, %v497
    %v560 = vmul.f32 %v435, %v501
    %v561 = vmul.f32 %v436, %v505
    %v562 = vmul.f32 %v437, %v509
    %v563 = vmul.f32 %v438, %v513
    %v564 = vmul.f32 %v439, %v517
    %v565 = vmul.f32 %v440, %v521
    %v566 = vmul.f32 %v441, %v525
    %v567 = vmul.f32 %v442, %v529
    %v568 = vmul.f32 %v443, %v533
    %v569 = vmul.f32 %v444, %v537
    %v570 = vmul.f32 %v445, %v541
    %v571 = vmul.f32 %v446, %v545
    %v572 = vadd.f32 %v547, %v548
    %v573 = vadd.f32 %v572, %v549
    %v574 = vadd.f32 %v573, %v550
    %v575 = vadd.f32 %v574, %v551
    %v576 = vadd.f32 %v575, %v552
    %v577 = vadd.f32 %v576, %v553
    %v578 = vadd.f32 %v577, %v554
    %v579 = vadd.f32 %v578, %v555
    %v580 = vadd.f32 %v579, %v556
    %v581 = vadd.f32 %v580, %v557
    %v582 = vadd.f32 %v581, %v558
    %v583 = vadd.f32 %v582, %v559
    %v584 = vadd.f32 %v583, %v560
    %v585 = vadd.f32 %v584, %v561
    %v586 = vadd.f32 %v585, %v562
    %v587 = vadd.f32 %v586, %v563
    %v588 = vadd.f32 %v587, %v564
    %v589 = vadd.f32 %v588, %v565
    %v590 = vadd.f32 %v589, %v566
    %v591 = vadd.f32 %v590, %v567
    %v592 = vadd.f32 %v591, %v568
    %v593 = vadd.f32 %v592, %v569
    %v594 = vadd.f32 %v593, %v570
    %v595 = vadd.f32 %v594, %v571
    %v596 = vrot.slane %v595, 4
    %v597 = vadd.f32 %v595, %v596
    %v598 = vrot.slane %v597, 2
    %v599 = vadd.f32 %v597, %v598
    %v600 = vrot.slane %v599, 1
    %v601 = vadd.f32 %v599, %v600
    %s602 = sld [smem:[#allocation2 + $0x14]]
    %v603 = vstv %s602
    %v604 = vadd.f32 %v601, %v603
    %v605 = vsub.f32 0.0, %v604
    %v606 = vmul.f32 %v605, 1.442695
    %v607 = vpow.pop %v606
    %v608 = vadd.f32 %v607, 1.0
    %v609 = vrcp.pop %v608
    %v610 = vmul.f32 1.0, %v609
    %611 = vst [vmem:[%s3] sm:$0x1] %v610
    // Predicated region
    $region18: #{attention_model.1} parent=1 // pred_check
      _
    $region19: #{attention_model.1} parent=1 // pred_check_branch
      %613 = sbr.rel (0) target = $region21
    $region20: #{attention_model.1} parent=1 // pred_region
      _
    $region21: #{attention_model.1} parent=1 // pred_fallthru
      _
    // Predicated region
    $region22: #{attention_model.1} parent=1 // pred_check
      _
    $region23: #{attention_model.1} parent=1 // pred_check_branch
      %615 = sbr.rel (0) target = $region25
    $region24: #{attention_model.1} parent=1 // pred_region
      _
    $region25: #{attention_model.1} parent=1 // pred_fallthru
      _
    %616 = vsyncpa [#allocation3], 1

</llo_original>
